<compile_context>
chip_gen: v7x
topology: tpu7x:2x2x1
jax: 0.10.0
libtpu: 0.0.40
codegen_flags: <defaults>
</compile_context>

<pallas_src>
import math

import jax
import jax.numpy as jnp
from jax.experimental import pallas as pl
from jax.experimental.pallas import tpu as pltpu


# ----------------------------- in-kernel special functions -----------------------------

def _digamma_lgamma(x, want_lgamma, shift):
    """digamma(x) (and optionally lgamma(x)).

    shift=True : valid for x >= 1 (shift-by-7 recurrence, then asymptotic series).
    shift=False: caller guarantees x >= 8 (series applied directly).

    Fused recurrence corrections (one reciprocal, one log):
      sum_{k=0..6} 1/(x+k)  = (N1*P2 + N2*P1) / (P1*P2)
      sum_{k=0..6} log(x+k) = log(P1*P2)
    with P1 = x(x+1)(x+2)(x+3), P2 = (x+4)(x+5)(x+6).
    f32-safe for x up to ~3e5 (P ~ x^7 vs 3.4e38).
    """
    if shift:
        x0, x1, x2, x3 = x, x + 1.0, x + 2.0, x + 3.0
        x4, x5, x6 = x + 4.0, x + 5.0, x + 6.0
        p01 = x0 * x1
        p23 = x2 * x3
        P1 = p01 * p23
        N1 = (x0 + x1) * p23 + (x2 + x3) * p01
        p45 = x4 * x5
        P2 = p45 * x6
        N2 = (x4 + x5) * x6 + p45
        P = P1 * P2
        corr_dg = (N1 * P2 + N2 * P1) * pl.reciprocal(P, approx=True)
        z = x + 7.0
    else:
        corr_dg = 0.0
        z = x

    zi = pl.reciprocal(z, approx=True)
    zi2 = zi * zi
    logz = jnp.log(z)

    # psi(z) ~ ln z - 1/(2z) - 1/(12 z^2) + 1/(120 z^4) - 1/(252 z^6)
    dg_series = zi2 * (1.0 / 12.0 - zi2 * (1.0 / 120.0 - zi2 * (1.0 / 252.0)))
    dg = logz - 0.5 * zi - dg_series - corr_dg

    if not want_lgamma:
        return dg, None

    corr_lg = jnp.log(P) if shift else 0.0
    half_log_2pi = 0.9189385332046727
    # lnGamma(z) ~ (z-1/2)ln z - z + 0.5 ln(2pi) + 1/(12z) - 1/(360z^3) + 1/(1260z^5) - 1/(1680z^7)
    lg_series = zi * (1.0 / 12.0
                      + zi2 * (-1.0 / 360.0
                               + zi2 * (1.0 / 1260.0 + zi2 * (-1.0 / 1680.0))))
    lg = (z - 0.5) * logz - z + half_log_2pi + lg_series - corr_lg
    return dg, lg


# ----------------------------- Pallas kernel -----------------------------

def _make_tmc_kernel(classes, batch, views, v_pad, b_tile, lambda_epochs):
    lgamma_c = float(math.lgamma(classes))   # lnB_uni = -lgamma(C)
    inv_b = 1.0 / float(batch)
    inv_lambda = 1.0 / float(lambda_epochs)
    shift_sums = classes < 8                 # S, S_alp >= C, so skip recurrence when C >= 8

    def kernel(step_ref, ev_ref, y_ref, out_ref, acc_ref):
        p = pl.program_id(0)                 # parallel batch half (one per TC on v7x)
        i = pl.program_id(1)                 # batch-tile index within the half
        nsteps = pl.num_programs(1)

        @pl.when(i == 0)
        def _init():
            acc_ref[...] = jnp.zeros_like(acc_ref)

        # annealing coefficient from the SMEM scalar global_step
        coef = jnp.minimum(jnp.float32(1.0),
                           step_ref[0].astype(jnp.float32) * inv_lambda)

        # one-hot labels and batch-validity mask (hoisted out of the view loop)
        cls = jax.lax.broadcasted_iota(jnp.int32, (classes, b_tile), 0)      # (C, Bt)
        label = (cls == y_ref[0]).astype(jnp.float32)                        # (C, Bt)
        not_label = 1.0 - label
        lane = jax.lax.broadcasted_iota(jnp.int32, (1, b_tile), 1)           # (1, Bt)
        g_idx = (p * nsteps + i) * b_tile + lane
        valid = (g_idx < batch).astype(jnp.float32)                          # (1, Bt)

        def view_body(v, carry):
            e = ev_ref[v].astype(jnp.float32)                                # (C, Bt)
            # alpha = softplus(e) + 1 >= 1 (stable softplus)
            alpha = jnp.maximum(e, 0.0) + jnp.log(1.0 + jnp.exp(-jnp.abs(e))) + 1.0

            dg_alpha, lg_alpha = _digamma_lgamma(alpha, True, True)
            S = jnp.sum(alpha, axis=0, keepdims=True)                        # (1, Bt)
            dg_S, _ = _digamma_lgamma(S, False, shift_sums)

            # CE term: A = sum_c label * (digamma(S) - digamma(alpha))
            A = jnp.sum(label * (dg_S - dg_alpha), axis=0, keepdims=True)

            # KL(alp || Dir(1,..,1)) with alp = (alpha-1)(1-label)+1.
            # Reuse dg_alpha/lg_alpha: off-label alp == alpha; on-label em == 0, lgamma(1) == 0.
            em = (alpha - 1.0) * not_label                                   # = alp - 1
            S_alp = jnp.sum(em, axis=0, keepdims=True) + float(classes)
            dg_Salp, lg_Salp = _digamma_lgamma(S_alp, True, shift_sums)
            sum_lg_alp = jnp.sum(not_label * lg_alpha, axis=0, keepdims=True)
            kl = (jnp.sum(em * (dg_alpha - dg_Salp), axis=0, keepdims=True)
                  + lg_Salp - sum_lg_alp - lgamma_c)

            acc_ref[v] += (A + coef * kl) * valid                            # (1, Bt)
            return carry

        jax.lax.fori_loop(0, views, view_body, 0)

        @pl.when(i == nsteps - 1)
        def _flush():
            # per-view batch-mean contribution from this half (padded rows stay 0)
            loss_rows = jnp.sum(acc_ref[...], axis=2) * inv_b                # (v_pad, 1)
            out_ref[...] = jnp.broadcast_to(
                loss_rows, (1, v_pad, 128)).astype(out_ref.dtype)

    return kernel


# ----------------------------- wrapper -----------------------------

def tmc_forward(evidence_list, y, global_step, classes, lambda_epochs=1, *,
                block_batch=128, num_splits=2):
    """Returns {'loss_twc{v}': scalar} matching TMC.forward(evidence, y, global_step).

    block_batch: batch tile riding the 128 lanes (multiple of 128; size it so that
      2 * V * C * block_batch * 4B plus a few (C, block_batch) f32 temporaries fits
      the scoped-VMEM budget — halve whatever is validated on v6e for v7x's 64 MiB VMEM).
    num_splits: independent batch halves on the leading "parallel" grid axis
      (2 keeps both v7x TensorCores busy; harmless serial loop on v5e/v6e).
    """
    views = len(evidence_list)
    batch, c = evidence_list[0].shape
    assert c == classes

    b_tile = block_batch
    chunk = num_splits * b_tile
    b_pad = ((batch + chunk - 1) // chunk) * chunk
    tiles_per_split = b_pad // chunk
    v_pad = max(8, ((views + 7) // 8) * 8)

    # Batch-on-lanes layout (V, C, B). Production callers should hand over this
    # layout (and bf16 evidence) directly to skip the host-side stack/transpose.
    ev = jnp.stack(list(evidence_list), axis=0)                 # (V, B, C), native dtype
    if ev.dtype not in (jnp.float32, jnp.bfloat16, jnp.float16):
        ev = ev.astype(jnp.float32)
    ev = jnp.transpose(ev, (0, 2, 1))                           # (V, C, B)
    y_in = jnp.asarray(y, dtype=jnp.int32).reshape(1, 1, batch)
    if b_pad > batch:
        ev = jnp.pad(ev, ((0, 0), (0, 0), (0, b_pad - batch)))
        y_in = jnp.pad(y_in, ((0, 0), (0, 0), (0, b_pad - batch)))
    step_arr = jnp.asarray([global_step], dtype=jnp.int32)      # SMEM scalar prefetch

    kernel = _make_tmc_kernel(classes, batch, views, v_pad, b_tile, float(lambda_epochs))

    out = pl.pallas_call(
        kernel,
        out_shape=jax.ShapeDtypeStruct((num_splits, v_pad, 128), jnp.float32),
        grid_spec=pltpu.PrefetchScalarGridSpec(
            num_scalar_prefetch=1,                              # global_step -> SMEM
            grid=(num_splits, tiles_per_split),
            in_specs=[
                pl.BlockSpec((views, classes, b_tile),
                             lambda p, i, step: (0, 0, p * tiles_per_split + i)),
                pl.BlockSpec((1, 1, b_tile),
                             lambda p, i, step: (0, 0, p * tiles_per_split + i)),
            ],
            out_specs=pl.BlockSpec((1, v_pad, 128), lambda p, i, step: (p, 0, 0)),
            scratch_shapes=[pltpu.VMEM((v_pad, 1, b_tile), jnp.float32)],
        ),
        compiler_params=pltpu.CompilerParams(
            dimension_semantics=("parallel", "arbitrary")),
    )(step_arr, ev, y_in)

    loss_per_view = jnp.sum(out[:, :views, 0], axis=0)          # combine the split halves
    return {f"loss_twc{v}": loss_per_view[v] for v in range(views)}


# ----------------------------- pure-JAX reference (for sanity) -----------------------------

def _ref_forward(evidence_list, y, global_step, classes, lambda_epochs=1):
    from jax.scipy.special import digamma, gammaln
    coef = min(1.0, float(global_step) / float(lambda_epochs))
    label = jax.nn.one_hot(jnp.asarray(y), classes, dtype=jnp.float32)
    out = {}
    for v, e in enumerate(evidence_list):
        alpha = jax.nn.softplus(e.astype(jnp.float32)) + 1.0
        S = alpha.sum(1, keepdims=True)
        A = (label * (digamma(S) - digamma(alpha))).sum(1, keepdims=True)
        alp = (alpha - 1.0) * (1.0 - label) + 1.0
        S_alp = alp.sum(1, keepdims=True)
        lnB = gammaln(S_alp) - gammaln(alp).sum(1, keepdims=True)
        lnB_uni = -gammaln(jnp.float32(classes))
        kl = ((alp - 1.0) * (digamma(alp) - digamma(S_alp))).sum(1, keepdims=True) + lnB + lnB_uni
        out[f"loss_twc{v}"] = (A + coef * kl).mean()
    return out


# ----------------------------- main -----------------------------

if __name__ == "__main__":
    classes = 4
    views = 3
    batch = 8
    lambda_epochs = 1
    global_step = 1

    key = jax.random.PRNGKey(0)
    keys = jax.random.split(key, views + 1)
    evidence = [jax.random.normal(keys[v], (batch, classes), dtype=jnp.float32)
                for v in range(views)]
    y = jax.random.randint(keys[-1], (batch,), 0, classes, dtype=jnp.int32)

    losses = tmc_forward(evidence, y, global_step, classes, lambda_epochs)
    losses = {k: jax.block_until_ready(v) for k, v in losses.items()}

    ref = _ref_forward(evidence, y, global_step, classes, lambda_epochs)
    for k in losses:
        assert jnp.allclose(losses[k], ref[k], rtol=1e-2, atol=1e-2), (k, losses[k], ref[k])

    print("KERNEL_OK")
</pallas_src>

<mosaic_0001>
module attributes {stable_mosaic.version = 11 : i64} {
  func.func @kernel(%arg0: i32, %arg1: i32, %arg2: memref<1xi32, #tpu.memory_space<smem>>, %arg3: memref<3x4x128xf32, #tpu.memory_space<vmem>>, %arg4: memref<1x1x128xi32, #tpu.memory_space<vmem>>, %arg5: memref<1x8x128xf32, #tpu.memory_space<vmem>>, %arg6: memref<8x1x128xf32, #tpu.memory_space<vmem>>) attributes {dimension_semantics = [#tpu.dimension_semantics<parallel>, #tpu.dimension_semantics<arbitrary>], iteration_bounds = array<i64: 2, 1>, scalar_prefetch = 1 : i64, scratch_operands = 1 : i64, tpu.core_type = #tpu.core_type<tc>, window_params = [{transform_indices = @transform_0, window_bounds = array<i64: 3, 4, 128>}, {transform_indices = @transform_1, window_bounds = array<i64: 1, 1, 128>}, {transform_indices = @transform_2, window_bounds = array<i64: 1, 8, 128>}]} {
    %c0_i32 = arith.constant 0 : i32
    %0 = arith.cmpi eq, %arg1, %c0_i32 : i32
    %1 = arith.extui %0 : i1 to i32
    %c0_i32_0 = arith.constant 0 : i32
    %2 = arith.cmpi ne, %1, %c0_i32_0 : i32
    scf.if %2 {
      %cst_11 = arith.constant 0.000000e+00 : f32
      %30 = vector.broadcast %cst_11 : f32 to vector<8x1x128xf32>
      %c0_12 = arith.constant 0 : index
      %c0_13 = arith.constant 0 : index
      %c0_14 = arith.constant 0 : index
      %31 = vector.load %arg6[%c0_12, %c0_13, %c0_14] : memref<8x1x128xf32, #tpu.memory_space<vmem>>, vector<8x1x128xf32>
      tpu.vector_store %arg6[%c0_12, %c0_13, %c0_14], %30 {strides = array<i32>} : memref<8x1x128xf32, #tpu.memory_space<vmem>>, vector<8x1x128xf32>,
    } else {
    }
    %c0 = arith.constant 0 : index
    %3 = memref.load %arg2[%c0] : memref<1xi32, #tpu.memory_space<smem>>
    %4 = arith.sitofp %3 : i32 to f32
    %cst = arith.constant 1.000000e+00 : f32
    %5 = arith.mulf %4, %cst : f32
    %cst_1 = arith.constant 1.000000e+00 : f32
    %6 = arith.minimumf %cst_1, %5 : f32
    %7 = tpu.iota {dimensions = array<i32: 0>} : vector<4x128xi32>
    %c0_2 = arith.constant 0 : index
    %c0_3 = arith.constant 0 : index
    %c0_4 = arith.constant 0 : index
    %8 = vector.load %arg4[%c0_2, %c0_3, %c0_4] : memref<1x1x128xi32, #tpu.memory_space<vmem>>, vector<1x1x128xi32>
    %9 = vector.shape_cast %8 : vector<1x1x128xi32> to vector<1x128xi32>
    %10 = vector.broadcast %9 : vector<1x128xi32> to vector<4x128xi32>
    %11 = arith.cmpi eq, %7, %10 : vector<4x128xi32>
    %12 = arith.extui %11 : vector<4x128xi1> to vector<4x128xi32>
    %13 = arith.sitofp %12 : vector<4x128xi32> to vector<4x128xf32>
    %cst_5 = arith.constant 1.000000e+00 : f32
    %14 = vector.broadcast %cst_5 : f32 to vector<4x128xf32>
    %15 = arith.subf %14, %13 : vector<4x128xf32>
    %16 = tpu.iota {dimensions = array<i32: 1>} : vector<1x128xi32>
    %c1_i32 = arith.constant 1 : i32
    %17 = arith.muli %arg0, %c1_i32 : i32
    %18 = arith.addi %17, %arg1 : i32
    %c128_i32 = arith.constant 128 : i32
    %19 = arith.muli %18, %c128_i32 : i32
    %20 = vector.broadcast %19 : i32 to vector<1x128xi32>
    %21 = arith.addi %20, %16 : vector<1x128xi32>
    %c8_i32 = arith.constant 8 : i32
    %22 = vector.broadcast %c8_i32 : i32 to vector<1x128xi32>
    %23 = arith.cmpi slt, %21, %22 : vector<1x128xi32>
    %24 = arith.extui %23 : vector<1x128xi1> to vector<1x128xi32>
    %25 = arith.sitofp %24 : vector<1x128xi32> to vector<1x128xf32>
    %c0_i32_6 = arith.constant 0 : i32
    %c3_i32 = arith.constant 3 : i32
    %26 = arith.addi %c0_i32_6, %c3_i32 : i32
    %c1_i32_7 = arith.constant 1 : i32
    scf.for %arg7 = %c0_i32_6 to %26 step %c1_i32_7  : i32 {
      %30 = arith.index_cast %arg7 : i32 to index
      %c0_11 = arith.constant 0 : index
      %c0_12 = arith.constant 0 : index
      %31 = vector.load %arg3[%30, %c0_11, %c0_12] : memref<3x4x128xf32, #tpu.memory_space<vmem>>, vector<1x4x128xf32>
      %32 = vector.shape_cast %31 : vector<1x4x128xf32> to vector<4x128xf32>
      %cst_13 = arith.constant 0.000000e+00 : f32
      %33 = vector.broadcast %cst_13 : f32 to vector<4x128xf32>
      %34 = arith.maximumf %32, %33 : vector<4x128xf32>
      %35 = math.absf %32 : vector<4x128xf32>
      %cst_14 = arith.constant 0.000000e+00 : f32
      %36 = vector.broadcast %cst_14 : f32 to vector<4x128xf32>
      %37 = arith.subf %36, %35 : vector<4x128xf32>
      %38 = math.exp %37 : vector<4x128xf32>
      %cst_15 = arith.constant 1.000000e+00 : f32
      %39 = vector.broadcast %cst_15 : f32 to vector<4x128xf32>
      %40 = arith.addf %39, %38 : vector<4x128xf32>
      %41 = math.log %40 : vector<4x128xf32>
      %42 = arith.addf %34, %41 : vector<4x128xf32>
      %cst_16 = arith.constant 1.000000e+00 : f32
      %43 = vector.broadcast %cst_16 : f32 to vector<4x128xf32>
      %44 = arith.addf %42, %43 : vector<4x128xf32>
      %cst_17 = arith.constant 1.000000e+00 : f32
      %45 = vector.broadcast %cst_17 : f32 to vector<4x128xf32>
      %46 = arith.addf %44, %45 : vector<4x128xf32>
      %cst_18 = arith.constant 2.000000e+00 : f32
      %47 = vector.broadcast %cst_18 : f32 to vector<4x128xf32>
      %48 = arith.addf %44, %47 : vector<4x128xf32>
      %cst_19 = arith.constant 3.000000e+00 : f32
      %49 = vector.broadcast %cst_19 : f32 to vector<4x128xf32>
      %50 = arith.addf %44, %49 : vector<4x128xf32>
      %cst_20 = arith.constant 4.000000e+00 : f32
      %51 = vector.broadcast %cst_20 : f32 to vector<4x128xf32>
      %52 = arith.addf %44, %51 : vector<4x128xf32>
      %cst_21 = arith.constant 5.000000e+00 : f32
      %53 = vector.broadcast %cst_21 : f32 to vector<4x128xf32>
      %54 = arith.addf %44, %53 : vector<4x128xf32>
      %cst_22 = arith.constant 6.000000e+00 : f32
      %55 = vector.broadcast %cst_22 : f32 to vector<4x128xf32>
      %56 = arith.addf %44, %55 : vector<4x128xf32>
      %57 = arith.mulf %44, %46 : vector<4x128xf32>
      %58 = arith.mulf %48, %50 : vector<4x128xf32>
      %59 = arith.mulf %57, %58 : vector<4x128xf32>
      %60 = arith.addf %44, %46 : vector<4x128xf32>
      %61 = arith.mulf %60, %58 : vector<4x128xf32>
      %62 = arith.addf %48, %50 : vector<4x128xf32>
      %63 = arith.mulf %62, %57 : vector<4x128xf32>
      %64 = arith.addf %61, %63 : vector<4x128xf32>
      %65 = arith.mulf %52, %54 : vector<4x128xf32>
      %66 = arith.mulf %65, %56 : vector<4x128xf32>
      %67 = arith.addf %52, %54 : vector<4x128xf32>
      %68 = arith.mulf %67, %56 : vector<4x128xf32>
      %69 = arith.addf %68, %65 : vector<4x128xf32>
      %70 = arith.mulf %59, %66 : vector<4x128xf32>
      %71 = arith.mulf %64, %66 : vector<4x128xf32>
      %72 = arith.mulf %69, %59 : vector<4x128xf32>
      %73 = arith.addf %71, %72 : vector<4x128xf32>
      %74 = tpu.reciprocal %70 {approx = true} : vector<4x128xf32> -> vector<4x128xf32>
      %75 = arith.mulf %73, %74 : vector<4x128xf32>
      %cst_23 = arith.constant 7.000000e+00 : f32
      %76 = vector.broadcast %cst_23 : f32 to vector<4x128xf32>
      %77 = arith.addf %44, %76 : vector<4x128xf32>
      %78 = tpu.reciprocal %77 {approx = true} : vector<4x128xf32> -> vector<4x128xf32>
      %79 = arith.mulf %78, %78 : vector<4x128xf32>
      %80 = math.log %77 : vector<4x128xf32>
      %cst_24 = arith.constant 0.0039682542 : f32
      %81 = vector.broadcast %cst_24 : f32 to vector<4x128xf32>
      %82 = arith.mulf %79, %81 : vector<4x128xf32>
      %cst_25 = arith.constant 0.00833333377 : f32
      %83 = vector.broadcast %cst_25 : f32 to vector<4x128xf32>
      %84 = arith.subf %83, %82 : vector<4x128xf32>
      %85 = arith.mulf %79, %84 : vector<4x128xf32>
      %cst_26 = arith.constant 0.0833333358 : f32
      %86 = vector.broadcast %cst_26 : f32 to vector<4x128xf32>
      %87 = arith.subf %86, %85 : vector<4x128xf32>
      %88 = arith.mulf %79, %87 : vector<4x128xf32>
      %cst_27 = arith.constant 5.000000e-01 : f32
      %89 = vector.broadcast %cst_27 : f32 to vector<4x128xf32>
      %90 = arith.mulf %89, %78 : vector<4x128xf32>
      %91 = arith.subf %80, %90 : vector<4x128xf32>
      %92 = arith.subf %91, %88 : vector<4x128xf32>
      %93 = arith.subf %92, %75 : vector<4x128xf32>
      %94 = math.log %70 : vector<4x128xf32>
      %cst_28 = arith.constant -5.95238118E-4 : f32
      %95 = vector.broadcast %cst_28 : f32 to vector<4x128xf32>
      %96 = arith.mulf %79, %95 : vector<4x128xf32>
      %cst_29 = arith.constant 7.93650805E-4 : f32
      %97 = vector.broadcast %cst_29 : f32 to vector<4x128xf32>
      %98 = arith.addf %97, %96 : vector<4x128xf32>
      %99 = arith.mulf %79, %98 : vector<4x128xf32>
      %cst_30 = arith.constant -0.00277777785 : f32
      %100 = vector.broadcast %cst_30 : f32 to vector<4x128xf32>
      %101 = arith.addf %100, %99 : vector<4x128xf32>
      %102 = arith.mulf %79, %101 : vector<4x128xf32>
      %cst_31 = arith.constant 0.0833333358 : f32
      %103 = vector.broadcast %cst_31 : f32 to vector<4x128xf32>
      %104 = arith.addf %103, %102 : vector<4x128xf32>
      %105 = arith.mulf %78, %104 : vector<4x128xf32>
      %cst_32 = arith.constant 5.000000e-01 : f32
      %106 = vector.broadcast %cst_32 : f32 to vector<4x128xf32>
      %107 = arith.subf %77, %106 : vector<4x128xf32>
      %108 = arith.mulf %107, %80 : vector<4x128xf32>
      %109 = arith.subf %108, %77 : vector<4x128xf32>
      %cst_33 = arith.constant 0.918938517 : f32
      %110 = vector.broadcast %cst_33 : f32 to vector<4x128xf32>
      %111 = arith.addf %109, %110 : vector<4x128xf32>
      %112 = arith.addf %111, %105 : vector<4x128xf32>
      %113 = arith.subf %112, %94 : vector<4x128xf32>
      %cst_34 = arith.constant dense<0.000000e+00> : vector<128xf32>
      %114 = vector.multi_reduction <add>, %44, %cst_34 [0] : vector<4x128xf32> to vector<128xf32>
      %115 = vector.shape_cast %114 : vector<128xf32> to vector<1x128xf32>
      %cst_35 = arith.constant 1.000000e+00 : f32
      %116 = vector.broadcast %cst_35 : f32 to vector<1x128xf32>
      %117 = arith.addf %115, %116 : vector<1x128xf32>
      %cst_36 = arith.constant 2.000000e+00 : f32
      %118 = vector.broadcast %cst_36 : f32 to vector<1x128xf32>
      %119 = arith.addf %115, %118 : vector<1x128xf32>
      %cst_37 = arith.constant 3.000000e+00 : f32
      %120 = vector.broadcast %cst_37 : f32 to vector<1x128xf32>
      %121 = arith.addf %115, %120 : vector<1x128xf32>
      %cst_38 = arith.constant 4.000000e+00 : f32
      %122 = vector.broadcast %cst_38 : f32 to vector<1x128xf32>
      %123 = arith.addf %115, %122 : vector<1x128xf32>
      %cst_39 = arith.constant 5.000000e+00 : f32
      %124 = vector.broadcast %cst_39 : f32 to vector<1x128xf32>
      %125 = arith.addf %115, %124 : vector<1x128xf32>
      %cst_40 = arith.constant 6.000000e+00 : f32
      %126 = vector.broadcast %cst_40 : f32 to vector<1x128xf32>
      %127 = arith.addf %115, %126 : vector<1x128xf32>
      %128 = arith.mulf %115, %117 : vector<1x128xf32>
      %129 = arith.mulf %119, %121 : vector<1x128xf32>
      %130 = arith.mulf %128, %129 : vector<1x128xf32>
      %131 = arith.addf %115, %117 : vector<1x128xf32>
      %132 = arith.mulf %131, %129 : vector<1x128xf32>
      %133 = arith.addf %119, %121 : vector<1x128xf32>
      %134 = arith.mulf %133, %128 : vector<1x128xf32>
      %135 = arith.addf %132, %134 : vector<1x128xf32>
      %136 = arith.mulf %123, %125 : vector<1x128xf32>
      %137 = arith.mulf %136, %127 : vector<1x128xf32>
      %138 = arith.addf %123, %125 : vector<1x128xf32>
      %139 = arith.mulf %138, %127 : vector<1x128xf32>
      %140 = arith.addf %139, %136 : vector<1x128xf32>
      %141 = arith.mulf %130, %137 : vector<1x128xf32>
      %142 = arith.mulf %135, %137 : vector<1x128xf32>
      %143 = arith.mulf %140, %130 : vector<1x128xf32>
      %144 = arith.addf %142, %143 : vector<1x128xf32>
      %145 = tpu.reciprocal %141 {approx = true} : vector<1x128xf32> -> vector<1x128xf32>
      %146 = arith.mulf %144, %145 : vector<1x128xf32>
      %cst_41 = arith.constant 7.000000e+00 : f32
      %147 = vector.broadcast %cst_41 : f32 to vector<1x128xf32>
      %148 = arith.addf %115, %147 : vector<1x128xf32>
      %149 = tpu.reciprocal %148 {approx = true} : vector<1x128xf32> -> vector<1x128xf32>
      %150 = arith.mulf %149, %149 : vector<1x128xf32>
      %151 = math.log %148 : vector<1x128xf32>
      %cst_42 = arith.constant 0.0039682542 : f32
      %152 = vector.broadcast %cst_42 : f32 to vector<1x128xf32>
      %153 = arith.mulf %150, %152 : vector<1x128xf32>
      %cst_43 = arith.constant 0.00833333377 : f32
      %154 = vector.broadcast %cst_43 : f32 to vector<1x128xf32>
      %155 = arith.subf %154, %153 : vector<1x128xf32>
      %156 = arith.mulf %150, %155 : vector<1x128xf32>
      %cst_44 = arith.constant 0.0833333358 : f32
      %157 = vector.broadcast %cst_44 : f32 to vector<1x128xf32>
      %158 = arith.subf %157, %156 : vector<1x128xf32>
      %159 = arith.mulf %150, %158 : vector<1x128xf32>
      %cst_45 = arith.constant 5.000000e-01 : f32
      %160 = vector.broadcast %cst_45 : f32 to vector<1x128xf32>
      %161 = arith.mulf %160, %149 : vector<1x128xf32>
      %162 = arith.subf %151, %161 : vector<1x128xf32>
      %163 = arith.subf %162, %159 : vector<1x128xf32>
      %164 = arith.subf %163, %146 : vector<1x128xf32>
      %165 = vector.broadcast %164 : vector<1x128xf32> to vector<4x128xf32>
      %166 = arith.subf %165, %93 : vector<4x128xf32>
      %167 = arith.mulf %13, %166 : vector<4x128xf32>
      %cst_46 = arith.constant dense<0.000000e+00> : vector<128xf32>
      %168 = vector.multi_reduction <add>, %167, %cst_46 [0] : vector<4x128xf32> to vector<128xf32>
      %169 = vector.shape_cast %168 : vector<128xf32> to vector<1x128xf32>
      %cst_47 = arith.constant 1.000000e+00 : f32
      %170 = vector.broadcast %cst_47 : f32 to vector<4x128xf32>
      %171 = arith.subf %44, %170 : vector<4x128xf32>
      %172 = arith.mulf %171, %15 : vector<4x128xf32>
      %cst_48 = arith.constant dense<0.000000e+00> : vector<128xf32>
      %173 = vector.multi_reduction <add>, %172, %cst_48 [0] : vector<4x128xf32> to vector<128xf32>
      %174 = vector.shape_cast %173 : vector<128xf32> to vector<1x128xf32>
      %cst_49 = arith.constant 4.000000e+00 : f32
      %175 = vector.broadcast %cst_49 : f32 to vector<1x128xf32>
      %176 = arith.addf %174, %175 : vector<1x128xf32>
      %cst_50 = arith.constant 1.000000e+00 : f32
      %177 = vector.broadcast %cst_50 : f32 to vector<1x128xf32>
      %178 = arith.addf %176, %177 : vector<1x128xf32>
      %cst_51 = arith.constant 2.000000e+00 : f32
      %179 = vector.broadcast %cst_51 : f32 to vector<1x128xf32>
      %180 = arith.addf %176, %179 : vector<1x128xf32>
      %cst_52 = arith.constant 3.000000e+00 : f32
      %181 = vector.broadcast %cst_52 : f32 to vector<1x128xf32>
      %182 = arith.addf %176, %181 : vector<1x128xf32>
      %cst_53 = arith.constant 4.000000e+00 : f32
      %183 = vector.broadcast %cst_53 : f32 to vector<1x128xf32>
      %184 = arith.addf %176, %183 : vector<1x128xf32>
      %cst_54 = arith.constant 5.000000e+00 : f32
      %185 = vector.broadcast %cst_54 : f32 to vector<1x128xf32>
      %186 = arith.addf %176, %185 : vector<1x128xf32>
      %cst_55 = arith.constant 6.000000e+00 : f32
      %187 = vector.broadcast %cst_55 : f32 to vector<1x128xf32>
      %188 = arith.addf %176, %187 : vector<1x128xf32>
      %189 = arith.mulf %176, %178 : vector<1x128xf32>
      %190 = arith.mulf %180, %182 : vector<1x128xf32>
      %191 = arith.mulf %189, %190 : vector<1x128xf32>
      %192 = arith.addf %176, %178 : vector<1x128xf32>
      %193 = arith.mulf %192, %190 : vector<1x128xf32>
      %194 = arith.addf %180, %182 : vector<1x128xf32>
      %195 = arith.mulf %194, %189 : vector<1x128xf32>
      %196 = arith.addf %193, %195 : vector<1x128xf32>
      %197 = arith.mulf %184, %186 : vector<1x128xf32>
      %198 = arith.mulf %197, %188 : vector<1x128xf32>
      %199 = arith.addf %184, %186 : vector<1x128xf32>
      %200 = arith.mulf %199, %188 : vector<1x128xf32>
      %201 = arith.addf %200, %197 : vector<1x128xf32>
      %202 = arith.mulf %191, %198 : vector<1x128xf32>
      %203 = arith.mulf %196, %198 : vector<1x128xf32>
      %204 = arith.mulf %201, %191 : vector<1x128xf32>
      %205 = arith.addf %203, %204 : vector<1x128xf32>
      %206 = tpu.reciprocal %202 {approx = true} : vector<1x128xf32> -> vector<1x128xf32>
      %207 = arith.mulf %205, %206 : vector<1x128xf32>
      %cst_56 = arith.constant 7.000000e+00 : f32
      %208 = vector.broadcast %cst_56 : f32 to vector<1x128xf32>
      %209 = arith.addf %176, %208 : vector<1x128xf32>
      %210 = tpu.reciprocal %209 {approx = true} : vector<1x128xf32> -> vector<1x128xf32>
      %211 = arith.mulf %210, %210 : vector<1x128xf32>
      %212 = math.log %209 : vector<1x128xf32>
      %cst_57 = arith.constant 0.0039682542 : f32
      %213 = vector.broadcast %cst_57 : f32 to vector<1x128xf32>
      %214 = arith.mulf %211, %213 : vector<1x128xf32>
      %cst_58 = arith.constant 0.00833333377 : f32
      %215 = vector.broadcast %cst_58 : f32 to vector<1x128xf32>
      %216 = arith.subf %215, %214 : vector<1x128xf32>
      %217 = arith.mulf %211, %216 : vector<1x128xf32>
      %cst_59 = arith.constant 0.0833333358 : f32
      %218 = vector.broadcast %cst_59 : f32 to vector<1x128xf32>
      %219 = arith.subf %218, %217 : vector<1x128xf32>
      %220 = arith.mulf %211, %219 : vector<1x128xf32>
      %cst_60 = arith.constant 5.000000e-01 : f32
      %221 = vector.broadcast %cst_60 : f32 to vector<1x128xf32>
      %222 = arith.mulf %221, %210 : vector<1x128xf32>
      %223 = arith.subf %212, %222 : vector<1x128xf32>
      %224 = arith.subf %223, %220 : vector<1x128xf32>
      %225 = arith.subf %224, %207 : vector<1x128xf32>
      %226 = math.log %202 : vector<1x128xf32>
      %cst_61 = arith.constant -5.95238118E-4 : f32
      %227 = vector.broadcast %cst_61 : f32 to vector<1x128xf32>
      %228 = arith.mulf %211, %227 : vector<1x128xf32>
      %cst_62 = arith.constant 7.93650805E-4 : f32
      %229 = vector.broadcast %cst_62 : f32 to vector<1x128xf32>
      %230 = arith.addf %229, %228 : vector<1x128xf32>
      %231 = arith.mulf %211, %230 : vector<1x128xf32>
      %cst_63 = arith.constant -0.00277777785 : f32
      %232 = vector.broadcast %cst_63 : f32 to vector<1x128xf32>
      %233 = arith.addf %232, %231 : vector<1x128xf32>
      %234 = arith.mulf %211, %233 : vector<1x128xf32>
      %cst_64 = arith.constant 0.0833333358 : f32
      %235 = vector.broadcast %cst_64 : f32 to vector<1x128xf32>
      %236 = arith.addf %235, %234 : vector<1x128xf32>
      %237 = arith.mulf %210, %236 : vector<1x128xf32>
      %cst_65 = arith.constant 5.000000e-01 : f32
      %238 = vector.broadcast %cst_65 : f32 to vector<1x128xf32>
      %239 = arith.subf %209, %238 : vector<1x128xf32>
      %240 = arith.mulf %239, %212 : vector<1x128xf32>
      %241 = arith.subf %240, %209 : vector<1x128xf32>
      %cst_66 = arith.constant 0.918938517 : f32
      %242 = vector.broadcast %cst_66 : f32 to vector<1x128xf32>
      %243 = arith.addf %241, %242 : vector<1x128xf32>
      %244 = arith.addf %243, %237 : vector<1x128xf32>
      %245 = arith.subf %244, %226 : vector<1x128xf32>
      %246 = arith.mulf %15, %113 : vector<4x128xf32>
      %cst_67 = arith.constant dense<0.000000e+00> : vector<128xf32>
      %247 = vector.multi_reduction <add>, %246, %cst_67 [0] : vector<4x128xf32> to vector<128xf32>
      %248 = vector.shape_cast %247 : vector<128xf32> to vector<1x128xf32>
      %249 = vector.broadcast %225 : vector<1x128xf32> to vector<4x128xf32>
      %250 = arith.subf %93, %249 : vector<4x128xf32>
      %251 = arith.mulf %172, %250 : vector<4x128xf32>
      %cst_68 = arith.constant dense<0.000000e+00> : vector<128xf32>
      %252 = vector.multi_reduction <add>, %251, %cst_68 [0] : vector<4x128xf32> to vector<128xf32>
      %253 = vector.shape_cast %252 : vector<128xf32> to vector<1x128xf32>
      %254 = arith.addf %253, %245 : vector<1x128xf32>
      %255 = arith.subf %254, %248 : vector<1x128xf32>
      %cst_69 = arith.constant 1.79175949 : f32
      %256 = vector.broadcast %cst_69 : f32 to vector<1x128xf32>
      %257 = arith.subf %255, %256 : vector<1x128xf32>
      %258 = arith.index_cast %arg7 : i32 to index
      %c0_70 = arith.constant 0 : index
      %c0_71 = arith.constant 0 : index
      %259 = vector.load %arg6[%258, %c0_70, %c0_71] : memref<8x1x128xf32, #tpu.memory_space<vmem>>, vector<1x1x128xf32>
      %260 = vector.shape_cast %259 : vector<1x1x128xf32> to vector<1x128xf32>
      %261 = vector.broadcast %6 : f32 to vector<1x128xf32>
      %262 = arith.mulf %261, %257 : vector<1x128xf32>
      %263 = arith.addf %169, %262 : vector<1x128xf32>
      %264 = arith.mulf %263, %25 : vector<1x128xf32>
      %265 = arith.addf %260, %264 : vector<1x128xf32>
      %266 = arith.index_cast %arg7 : i32 to index
      %c0_72 = arith.constant 0 : index
      %c0_73 = arith.constant 0 : index
      %267 = vector.load %arg6[%266, %c0_72, %c0_73] : memref<8x1x128xf32, #tpu.memory_space<vmem>>, vector<1x1x128xf32>
      %268 = vector.shape_cast %267 : vector<1x1x128xf32> to vector<1x128xf32>
      %269 = vector.shape_cast %265 : vector<1x128xf32> to vector<1x1x128xf32>
      tpu.vector_store %arg6[%266, %c0_72, %c0_73], %269 {strides = array<i32>} : memref<8x1x128xf32, #tpu.memory_space<vmem>>, vector<1x1x128xf32>,
    }
    %c3_i32_8 = arith.constant 3 : i32
    %c0_i32_9 = arith.constant 0 : i32
    %27 = arith.cmpi eq, %arg1, %c0_i32_9 : i32
    %28 = arith.extui %27 : i1 to i32
    %c0_i32_10 = arith.constant 0 : i32
    %29 = arith.cmpi ne, %28, %c0_i32_10 : i32
    scf.if %29 {
      %c0_11 = arith.constant 0 : index
      %c0_12 = arith.constant 0 : index
      %c0_13 = arith.constant 0 : index
      %30 = vector.load %arg6[%c0_11, %c0_12, %c0_13] : memref<8x1x128xf32, #tpu.memory_space<vmem>>, vector<8x1x128xf32>
      %cst_14 = arith.constant dense<0.000000e+00> : vector<8x1xf32>
      %31 = vector.multi_reduction <add>, %30, %cst_14 [2] : vector<8x1x128xf32> to vector<8x1xf32>
      %cst_15 = arith.constant 1.250000e-01 : f32
      %32 = vector.broadcast %cst_15 : f32 to vector<8x1xf32>
      %33 = arith.mulf %31, %32 : vector<8x1xf32>
      %34 = vector.shape_cast %33 : vector<8x1xf32> to vector<1x8x1xf32>
      %35 = vector.broadcast %34 : vector<1x8x1xf32> to vector<1x8x128xf32>
      %c0_16 = arith.constant 0 : index
      %c0_17 = arith.constant 0 : index
      %c0_18 = arith.constant 0 : index
      %36 = vector.load %arg5[%c0_16, %c0_17, %c0_18] : memref<1x8x128xf32, #tpu.memory_space<vmem>>, vector<1x8x128xf32>
      tpu.vector_store %arg5[%c0_16, %c0_17, %c0_18], %35 {strides = array<i32>} : memref<1x8x128xf32, #tpu.memory_space<vmem>>, vector<1x8x128xf32>,
    } else {
    }
    return
  }
  func.func @transform_0(%arg0: i32, %arg1: i32, %arg2: memref<1xi32, #tpu.memory_space<smem>>) -> (i32, i32, i32) {
    %c1_i32 = arith.constant 1 : i32
    %0 = arith.muli %arg0, %c1_i32 : i32
    %1 = arith.addi %0, %arg1 : i32
    %c0_i32 = arith.constant 0 : i32
    %c0_i32_0 = arith.constant 0 : i32
    %c0_i32_1 = arith.constant 0 : i32
    return %c0_i32, %c0_i32_0, %1 : i32, i32, i32
  }
  func.func @transform_1(%arg0: i32, %arg1: i32, %arg2: memref<1xi32, #tpu.memory_space<smem>>) -> (i32, i32, i32) {
    %c1_i32 = arith.constant 1 : i32
    %0 = arith.muli %arg0, %c1_i32 : i32
    %1 = arith.addi %0, %arg1 : i32
    %c0_i32 = arith.constant 0 : i32
    %c0_i32_0 = arith.constant 0 : i32
    %c0_i32_1 = arith.constant 0 : i32
    return %c0_i32, %c0_i32_0, %1 : i32, i32, i32
  }
  func.func @transform_2(%arg0: i32, %arg1: i32, %arg2: memref<1xi32, #tpu.memory_space<smem>>) -> (i32, i32, i32) {
    %c0_i32 = arith.constant 0 : i32
    %c0_i32_0 = arith.constant 0 : i32
    %c0_i32_1 = arith.constant 0 : i32
    return %arg0, %c0_i32, %c0_i32_0 : i32, i32, i32
  }
}

</mosaic_0001>

<llo_original>
// kernel: tpu_custom_call.1
$region0: #{tpu_custom_call.1}
  #allocation0 [shape = 'u32[]', space=smem, size = 0x4, offset = 0x4, fixed_abs, tag = 'smem constant byte address 0x4 - core index']
  #allocation1 [shape = 'u32[144,128]{1,0:T(1,128)}', space=vmem, size = 0x12000, scoped, tag = 'internal scratch']
  #allocation2 [shape = 'f32[8,1,128]{2,1,0:T(1,128)}', space=vmem, size = 0x1000, scoped, tag = 'scratch operand']
  #allocation3 [shape = 's32[1]{0}', space=sflag, size = 0x4, scoped, tag = 'scoped memory for tpu_custom_call.1']
  #allocation4 [shape = 's32[1]{0:T(128)S(6)}', space=smem, size = 0x200, scoped, tag = 'prefetched SMEM operand 0']
  %s0 = inlined_call_operand.<no memory space> [shape: s32[1], index: 0, kind: input, shape index: {}]
  %s1 = inlined_call_operand.hbm [shape: f32[3,4,256], index: 1, kind: input, shape index: {}]
  %s2 = inlined_call_operand.vmem [shape: s32[1,1,256], index: 2, kind: input, shape index: {}]
  %s3 = inlined_call_operand.hbm [shape: f32[2,8,128], index: 3, kind: output, shape index: {}]
  %s4 = sld [smem:[#allocation0]]
  $region60: #{tpu_custom_call.1} parent=0
    _
  %s6 = ssub.s32 1, %s4
  %s7 = scalar_select 0, %s6, %s4
  %8 = sst [smem:[#allocation4]] %s0
  $region1: #{tpu_custom_call.1} parent=0
    #allocation5 [shape = 'u8[12288]{0}', space=vmem, size = 0x3000, scoped, tag = 'input window, operand 1']
    #allocation6 [shape = 's32[2]{0}', space=sflag, size = 0x8, scoped, tag = 'scoped memory for tpu_custom_call.1']
    #allocation7 [shape = 's32[2]{0}', space=sflag, size = 0x8, scoped, tag = 'scoped memory for tpu_custom_call.1']
    #allocation8 [shape = 'u8[8192]{0}', space=vmem, size = 0x2000, scoped, tag = 'output window, operand 0']
    %9 = vsyncpa [#allocation6], 0
    %s10 = scalar_lea.sflag [#allocation6], 1
    %11 = vsyncpa %s10, 0
    %12 = vsyncpa [#allocation7], 0
    %s13 = scalar_lea.sflag [#allocation7], 1
    %14 = vsyncpa %s13, 0
    loop: start=0, step=1, limit=4
    $region2: #{tpu_custom_call.1} parent=1 // loop_pre_header
      _
    $region3: #{tpu_custom_call.1} parent=1 // loop_header
      %s16 = sphi 0, %s20
      %p17 = scmp.ge.s32.totalorder %s16, 4
      %s23 = sphi 0, %s35
      %s24 = sphi 0, %s31
      %s25 = sphi 0, %s23
      %s26 = sphi 0, %s24
      %s27 = sphi 0, %s25
      %s28 = sphi 0, %s26
      %s40 = sphi 0, %s42
      %s43 = sphi 0, %s40
      %s44 = sphi 0, %s43
      %s60 = sphi 0, %s44
      %s68 = sphi 0, %s70
      %s71 = sphi 0, %s68
      %s72 = sphi 0, %s71
      %s88 = sphi 0, %s72
      %s94 = sphi 0, %s96
      %s97 = sphi 0, %s94
      %s98 = sphi 0, %s97
      %s114 = sphi 0, %s98
    $region4: #{tpu_custom_call.1} parent=1 // loop_header_branch
      %19 = sbr.rel (%p17) target = $region8
    $region5: #{tpu_custom_call.1} parent=1 // loop_body
      %s21 = ssub.s32 %s16, 1
      %s22 = ssub.s32 %s16, 2
      %s29 = sadd.s32 1, %s24
      %p30 = scmp.ge.s32.totalorder %s29, 1
      %s31 = scalar_select %p30, 0, %s29
      %s32 = sadd.s32 1, %s23
      %s33 = scalar_select %p30, %s32, %s23
      %p34 = scmp.ge.s32.totalorder %s33, 2
      %s35 = scalar_select %p34, 0, %s33
      %s36 = sadd.s32 %s23, %s24
      %s37 = sadd.s32 %s35, %s31
      %s38 = ssub.s32 %s36, %s37
      %p39 = scmp.eq.s32.totalorder %s38, 0
      %s41 = sadd.s32 %s40, 1
      %s42 = scalar_select %p39, %s40, %s41
      %p45 = pneg %p39
      %p46 = scmp.eq.s32.totalorder %s16, 1
      %p47 = por %p45, %p46
      %p48 = scmp.ne.s32.totalorder %s40, %s43
      %p49 = scmp.eq.s32.totalorder %s16, 0
      %p50 = por %p48, %p49
      %p51 = scmp.ne.s32.totalorder %s40, %s43
      %p52 = scmp.eq.s32.totalorder %s21, 1
      %p53 = por %p51, %p52
      %p54 = scmp.ne.s32.totalorder %s43, %s44
      %p55 = scmp.eq.s32.totalorder %s21, 0
      %p56 = por %p54, %p55
      %p57 = scmp.ne.s32.totalorder %s43, %s44
      %p58 = scmp.eq.s32.totalorder %s22, 1
      %p59 = por %p57, %p58
      %p61 = scmp.ne.s32.totalorder %s44, %s60
      %p62 = scmp.eq.s32.totalorder %s22, 0
      %p63 = por %p61, %p62
      %s64 = sadd.s32 %s23, %s24
      %s65 = sadd.s32 %s35, %s31
      %s66 = ssub.s32 %s64, %s65
      %p67 = scmp.eq.s32.totalorder %s66, 0
      %s69 = sadd.s32 %s68, 1
      %s70 = scalar_select %p67, %s68, %s69
      %p73 = pneg %p67
      %p74 = scmp.eq.s32.totalorder %s16, 1
      %p75 = por %p73, %p74
      %p76 = scmp.ne.s32.totalorder %s68, %s71
      %p77 = scmp.eq.s32.totalorder %s16, 0
      %p78 = por %p76, %p77
      %p79 = scmp.ne.s32.totalorder %s68, %s71
      %p80 = scmp.eq.s32.totalorder %s21, 1
      %p81 = por %p79, %p80
      %p82 = scmp.ne.s32.totalorder %s71, %s72
      %p83 = scmp.eq.s32.totalorder %s21, 0
      %p84 = por %p82, %p83
      %p85 = scmp.ne.s32.totalorder %s71, %s72
      %p86 = scmp.eq.s32.totalorder %s22, 1
      %p87 = por %p85, %p86
      %p89 = scmp.ne.s32.totalorder %s72, %s88
      %p90 = scmp.eq.s32.totalorder %s22, 0
      %p91 = por %p89, %p90
      %s92 = ssub.s32 %s23, %s35
      %p93 = scmp.eq.s32.totalorder %s92, 0
      %s95 = sadd.s32 %s94, 1
      %s96 = scalar_select %p93, %s94, %s95
      %p99 = pneg %p93
      %p100 = scmp.eq.s32.totalorder %s16, 1
      %p101 = por %p99, %p100
      %p102 = scmp.ne.s32.totalorder %s94, %s97
      %p103 = scmp.eq.s32.totalorder %s16, 0
      %p104 = por %p102, %p103
      %p105 = scmp.ne.s32.totalorder %s94, %s97
      %p106 = scmp.eq.s32.totalorder %s21, 1
      %p107 = por %p105, %p106
      %p108 = scmp.ne.s32.totalorder %s97, %s98
      %p109 = scmp.eq.s32.totalorder %s21, 0
      %p110 = por %p108, %p109
      %p111 = scmp.ne.s32.totalorder %s97, %s98
      %p112 = scmp.eq.s32.totalorder %s22, 1
      %p113 = por %p111, %p112
      %p115 = scmp.ne.s32.totalorder %s98, %s114
      %p116 = scmp.eq.s32.totalorder %s22, 0
      %p117 = por %p115, %p116
      %p118 = scmp.le.s32.totalorder 1, %s16
      %p119 = scmp.lt.s32.totalorder %s16, 3
      %p120 = pnand %p118, %p119
      %p121 = pneg %p120
      // Predicated region
      $region9: #{tpu_custom_call.1} parent=5 // pred_check
        _
      $region10: #{tpu_custom_call.1} parent=5 // pred_check_branch
        %123 = sbr.rel (%p120) target = $region12
      $region11: #{tpu_custom_call.1} parent=5 // pred_region
        %s124 = ssub.s32 %s16, 1
      $region12: #{tpu_custom_call.1} parent=5 // pred_fallthru
        _
      %p125 = scmp.lt.s32.totalorder %s16, 2
      // Predicated region
      $region13: #{tpu_custom_call.1} parent=5 // pred_check
        %p126 = pneg %p125
      $region14: #{tpu_custom_call.1} parent=5 // pred_check_branch
        %128 = sbr.rel (%p126) target = $region16
      $region15: #{tpu_custom_call.1} parent=5 // pred_region
        // Predicated region
        $region17: #{tpu_custom_call.1} parent=15 // pred_check
          %p129 = pneg %p50
        $region18: #{tpu_custom_call.1} parent=15 // pred_check_branch
          %131 = sbr.rel (%p129) target = $region20
        $region19: #{tpu_custom_call.1} parent=15 // pred_region
          %s132 = sand.u32 %s40, 1
          %s133 = scalar_lea.sflag [#allocation6], %s132
          %s134 = sand.u32 %s40, 1
          %s135 = smul.addr %s134, 12
          %s136 = scalar_lea.vmem [#allocation5], %s135
          %s137 = sadd.s32 %s23, %s24
          %s139 = ssub.s32 192, 192
          %140 = vsyncadd %s133, %s139
          %s141 = smul.addr %s137, 64
          %s142 = scalar_lea.hbm %s1, %s141
          %s143 = sshll.u32 %s136, 4
          %s144 = int_to_ptr.vmem [resolvable:$true] %s143
          %149 = dma.hbm_to_vmem [thread:$0]  %s142, 192, %s144, %s133, 128, 64, 4
        $region20: #{tpu_custom_call.1} parent=15 // pred_fallthru
          _
        // Predicated region
        $region21: #{tpu_custom_call.1} parent=15 // pred_check
          %p150 = pneg %p78
        $region22: #{tpu_custom_call.1} parent=15 // pred_check_branch
          %152 = sbr.rel (%p150) target = $region24
        $region23: #{tpu_custom_call.1} parent=15 // pred_region
          %s153 = sadd.s32 %s23, %s24
          %p154 = scmp.lt.s32.totalorder %s153, 1
          %s155 = scalar_select %p154, %s153, 1
          %s156 = scalar_lea.vmem %s2, %s155
          %s157 = sadd.s32 %s23, %s24
        $region24: #{tpu_custom_call.1} parent=15 // pred_fallthru
          _
      $region16: #{tpu_custom_call.1} parent=5 // pred_fallthru
        _
      %p158 = scmp.le.s32.totalorder 1, %s16
      %p159 = scmp.lt.s32.totalorder %s16, 3
      %p160 = pnand %p158, %p159
      %p161 = pneg %p160
      // Predicated region
      $region25: #{tpu_custom_call.1} parent=5 // pred_check
        _
      $region26: #{tpu_custom_call.1} parent=5 // pred_check_branch
        %163 = sbr.rel (%p160) target = $region28
      $region27: #{tpu_custom_call.1} parent=5 // pred_region
        %s164 = ssub.s32 %s16, 1
        %s165 = sand.u32 %s43, 1
        %s166 = scalar_lea.sflag [#allocation6], %s165
        %s167 = sand.u32 %s43, 1
        %s168 = smul.addr %s167, 12
        %s169 = scalar_lea.vmem [#allocation5], %s168
        // Predicated region
        $region29: #{tpu_custom_call.1} parent=27 // pred_check
          %p170 = pneg %p56
        $region30: #{tpu_custom_call.1} parent=27 // pred_check_branch
          %172 = sbr.rel (%p170) target = $region32
        $region31: #{tpu_custom_call.1} parent=27 // pred_region
          %173 = dma.done %s166, 192
        $region32: #{tpu_custom_call.1} parent=27 // pred_fallthru
          _
        %s174 = sand.u32 %s43, 1
        %s175 = scalar_lea.sflag [#allocation6], %s174
        %s176 = sand.u32 %s43, 1
        %s177 = smul.addr %s176, 12
        %s178 = scalar_lea.vmem [#allocation5], %s177
        %p179 = pneg %p56
        %p180 = pneg %p53
        %s181 = sadd.s32 %s25, %s26
        %p182 = scmp.lt.s32.totalorder %s181, 1
        %s183 = scalar_select %p182, %s181, 1
        %s184 = scalar_lea.vmem %s2, %s183
        %p185 = pneg %p84
        %p186 = pneg %p81
        %p187 = pneg %p110
        %p188 = pneg %p107
        %s189 = sand.u32 %s97, 1
        %s190 = scalar_lea.sflag [#allocation7], %s189
        %s191 = sand.u32 %s97, 1
        %s192 = smul.addr %s191, 8
        %s193 = scalar_lea.vmem [#allocation8], %s192
        %s194 = sadd.s32 %s25, %s26
        %s195 = sadd.s32 %s25, %s26
        %p196 = scmp.lt.s32.totalorder %s195, 1
        %s197 = scalar_select %p196, %s195, 1
        %s198 = scalar_lea.vmem %s2, %s197
        %s199 = sadd.s32 %s25, %s26
        %p200 = scmp.eq.s32.totalorder %s26, 0
        // Predicated region
        $region33: #{tpu_custom_call.1} parent=27 // pred_check
          %p201 = pneg %p200
        $region34: #{tpu_custom_call.1} parent=27 // pred_check_branch
          %203 = sbr.rel (%p201) target = $region36
        $region35: #{tpu_custom_call.1} parent=27 // pred_region
          %204 = vst [vmem:[#allocation2] sm:$0x1] 0.0
          %205 = vst [vmem:[#allocation2 + $0x1] sm:$0x1] 0.0
          %206 = vst [vmem:[#allocation2 + $0x2] sm:$0x1] 0.0
          %207 = vst [vmem:[#allocation2 + $0x3] sm:$0x1] 0.0
          %208 = vst [vmem:[#allocation2 + $0x4] sm:$0x1] 0.0
          %209 = vst [vmem:[#allocation2 + $0x5] sm:$0x1] 0.0
          %210 = vst [vmem:[#allocation2 + $0x6] sm:$0x1] 0.0
          %211 = vst [vmem:[#allocation2 + $0x7] sm:$0x1] 0.0
        $region36: #{tpu_custom_call.1} parent=27 // pred_fallthru
          _
        %s212 = sld [smem:[#allocation4]]
        %s213 = scvt.s32.f32 %s212
        %s214 = smin.f32 %s213, 1.0
        %v215 = vlaneseq
        %v216 = vshrl.u32 %v215, 7
        %v217 = vld [vmem:[%s198] sm:$0x1]
        %v218 = vlaneseq
        %v219 = vshrl.u32 %v218, 7
        %v220 = vsub.s32 0, %v219
        %v221 = vrot.slane %v217, %v220
        %vm222 = vcmp.eq.s32.totalorder %v216, %v221
        %v223 = vsel %vm222, 1, 0
        %v224 = vcvt.s32.f32 %v223
        %v225 = vsub.f32 1.0, %v224
        %v226 = vlaneseq
        %v227 = vand.u32 %v226, 127
        %s228 = sadd.s32 %s25, %s26
        %s229 = smul.u32 %s228, 128
        %v230 = vstv %s229
        %v231 = vadd.s32 %v230, %v227
        %vm232 = vcmp.lt.s32.totalorder %v231, 8
        %v233 = vsel %vm232, 1, 0
        %v234 = vcvt.s32.f32 %v233
        loop: start=0, step=1, limit=3
        $region37: #{tpu_custom_call.1} parent=27 // loop_pre_header
          _
        $region38: #{tpu_custom_call.1} parent=27 // loop_header
          %s236 = sphi 0, %s240
          %p237 = scmp.ge.s32.totalorder %s236, 3
        $region39: #{tpu_custom_call.1} parent=27 // loop_header_branch
          %239 = sbr.rel (%p237) target = $region43
        $region40: #{tpu_custom_call.1} parent=27 // loop_body
          %s241 = smul.u32 %s236, 4
          %s242 = scalar_lea.vmem %s169, %s241 [#allocation5]
          %v243 = vld [vmem:[%s242] sm:$0xf]
          %v244 = vmax.f32 %v243, 0.0
          %v245 = vand.u32 2147483647, %v243
          %v246 = vsub.f32 0.0, %v245
          %v247 = vmul.f32 %v246, 1.442695
          %v248 = vpow.pop %v247
          %v249 = vadd.f32 %v248, 1.0
          %v250 = vlog2.pop %v249
          %v251 = vmul.f32 %v250, 0.6931472
          %v252 = vadd.f32 %v244, %v251
          %v253 = vadd.f32 %v252, 1.0
          %v254 = vadd.f32 %v253, 1.0
          %v255 = vadd.f32 %v253, 2.0
          %v256 = vadd.f32 %v253, 3.0
          %v257 = vadd.f32 %v253, 4.0
          %v258 = vadd.f32 %v253, 5.0
          %v259 = vadd.f32 %v253, 6.0
          %v260 = vmul.f32 %v253, %v254
          %v261 = vmul.f32 %v255, %v256
          %v262 = vmul.f32 %v260, %v261
          %v263 = vadd.f32 %v253, %v254
          %v264 = vmul.f32 %v263, %v261
          %v265 = vadd.f32 %v255, %v256
          %v266 = vmul.f32 %v265, %v260
          %v267 = vadd.f32 %v264, %v266
          %v268 = vmul.f32 %v257, %v258
          %v269 = vmul.f32 %v268, %v259
          %v270 = vadd.f32 %v257, %v258
          %v271 = vmul.f32 %v270, %v259
          %v272 = vadd.f32 %v271, %v268
          %v273 = vmul.f32 %v262, %v269
          %v274 = vmul.f32 %v267, %v269
          %v275 = vmul.f32 %v272, %v262
          %v276 = vadd.f32 %v274, %v275
          %v277 = vrcp.pop %v273
          %v278 = vmul.f32 %v276, %v277
          %v279 = vadd.f32 %v253, 7.0
          %v280 = vrcp.pop %v279
          %v281 = vmul.f32 %v280, %v280
          %v282 = vlog2.pop %v279
          %v283 = vmul.f32 %v282, 0.6931472
          %v284 = vmul.f32 %v281, 0.003968254
          %v285 = vsub.f32 0.008333334, %v284
          %v286 = vmul.f32 %v281, %v285
          %v287 = vsub.f32 0.083333336, %v286
          %v288 = vmul.f32 %v281, %v287
          %v289 = vmul.f32 %v280, 0.5
          %v290 = vsub.f32 %v283, %v289
          %v291 = vsub.f32 %v290, %v288
          %v292 = vsub.f32 %v291, %v278
          %v293 = vlog2.pop %v273
          %v294 = vmul.f32 %v293, 0.6931472
          %v295 = vmul.f32 %v281, -0.0005952381
          %v296 = vadd.f32 %v295, 0.0007936508
          %v297 = vmul.f32 %v281, %v296
          %v298 = vadd.f32 %v297, -0.0027777778
          %v299 = vmul.f32 %v281, %v298
          %v300 = vadd.f32 %v299, 0.083333336
          %v301 = vmul.f32 %v280, %v300
          %v302 = vsub.f32 %v279, 0.5
          %v303 = vmul.f32 %v302, %v283
          %v304 = vsub.f32 %v303, %v279
          %v305 = vadd.f32 %v304, 0.9189385
          %v306 = vadd.f32 %v305, %v301
          %v307 = vsub.f32 %v306, %v294
          %vm308 = vcmask 1043456
          %v309 = vsel %vm308, %v253, 0.0
          %v310 = vrot.slane %v309, 4
          %v311 = vadd.f32 %v309, %v310
          %v312 = vrot.slane %v311, 2
          %v313 = vadd.f32 %v311, %v312
          %v314 = vrot.slane %v313, 1
          %v315 = vadd.f32 %v313, %v314
          %v316 = vadd.f32 %v315, 1.0
          %v317 = vadd.f32 %v315, 2.0
          %v318 = vadd.f32 %v315, 3.0
          %v319 = vadd.f32 %v315, 4.0
          %v320 = vadd.f32 %v315, 5.0
          %v321 = vadd.f32 %v315, 6.0
          %v322 = vmul.f32 %v315, %v316
          %v323 = vmul.f32 %v317, %v318
          %v324 = vmul.f32 %v322, %v323
          %v325 = vadd.f32 %v315, %v316
          %v326 = vmul.f32 %v325, %v323
          %v327 = vadd.f32 %v317, %v318
          %v328 = vmul.f32 %v327, %v322
          %v329 = vadd.f32 %v326, %v328
          %v330 = vmul.f32 %v319, %v320
          %v331 = vmul.f32 %v330, %v321
          %v332 = vadd.f32 %v319, %v320
          %v333 = vmul.f32 %v332, %v321
          %v334 = vadd.f32 %v333, %v330
          %v335 = vmul.f32 %v324, %v331
          %v336 = vmul.f32 %v329, %v331
          %v337 = vmul.f32 %v334, %v324
          %v338 = vadd.f32 %v336, %v337
          %v339 = vrcp.pop %v335
          %v340 = vmul.f32 %v338, %v339
          %v341 = vadd.f32 %v315, 7.0
          %v342 = vrcp.pop %v341
          %v343 = vmul.f32 %v342, %v342
          %v344 = vlog2.pop %v341
          %v345 = vmul.f32 %v344, 0.6931472
          %v346 = vmul.f32 %v343, 0.003968254
          %v347 = vsub.f32 0.008333334, %v346
          %v348 = vmul.f32 %v343, %v347
          %v349 = vsub.f32 0.083333336, %v348
          %v350 = vmul.f32 %v343, %v349
          %v351 = vmul.f32 %v342, 0.5
          %v352 = vsub.f32 %v345, %v351
          %v353 = vsub.f32 %v352, %v350
          %v354 = vsub.f32 %v353, %v340
          %v355 = vsub.f32 %v354, %v292
          %v356 = vmul.f32 %v224, %v355
          %v357 = vsel %vm308, %v356, 0.0
          %v358 = vrot.slane %v357, 4
          %v359 = vadd.f32 %v357, %v358
          %v360 = vrot.slane %v359, 2
          %v361 = vadd.f32 %v359, %v360
          %v362 = vrot.slane %v361, 1
          %v363 = vadd.f32 %v361, %v362
          %v364 = vsub.f32 %v253, 1.0
          %v365 = vmul.f32 %v364, %v225
          %v366 = vsel %vm308, %v365, 0.0
          %v367 = vrot.slane %v366, 4
          %v368 = vadd.f32 %v366, %v367
          %v369 = vrot.slane %v368, 2
          %v370 = vadd.f32 %v368, %v369
          %v371 = vrot.slane %v370, 1
          %v372 = vadd.f32 %v370, %v371
          %v373 = vadd.f32 %v372, 4.0
          %v374 = vadd.f32 %v373, 1.0
          %v375 = vadd.f32 %v373, 2.0
          %v376 = vadd.f32 %v373, 3.0
          %v377 = vadd.f32 %v373, 4.0
          %v378 = vadd.f32 %v373, 5.0
          %v379 = vadd.f32 %v373, 6.0
          %v380 = vmul.f32 %v373, %v374
          %v381 = vmul.f32 %v375, %v376
          %v382 = vmul.f32 %v380, %v381
          %v383 = vadd.f32 %v373, %v374
          %v384 = vmul.f32 %v383, %v381
          %v385 = vadd.f32 %v375, %v376
          %v386 = vmul.f32 %v385, %v380
          %v387 = vadd.f32 %v384, %v386
          %v388 = vmul.f32 %v377, %v378
          %v389 = vmul.f32 %v388, %v379
          %v390 = vadd.f32 %v377, %v378
          %v391 = vmul.f32 %v390, %v379
          %v392 = vadd.f32 %v391, %v388
          %v393 = vmul.f32 %v382, %v389
          %v394 = vmul.f32 %v387, %v389
          %v395 = vmul.f32 %v392, %v382
          %v396 = vadd.f32 %v394, %v395
          %v397 = vrcp.pop %v393
          %v398 = vmul.f32 %v396, %v397
          %v399 = vadd.f32 %v373, 7.0
          %v400 = vrcp.pop %v399
          %v401 = vmul.f32 %v400, %v400
          %v402 = vlog2.pop %v399
          %v403 = vmul.f32 %v402, 0.6931472
          %v404 = vmul.f32 %v401, 0.003968254
          %v405 = vsub.f32 0.008333334, %v404
          %v406 = vmul.f32 %v401, %v405
          %v407 = vsub.f32 0.083333336, %v406
          %v408 = vmul.f32 %v401, %v407
          %v409 = vmul.f32 %v400, 0.5
          %v410 = vsub.f32 %v403, %v409
          %v411 = vsub.f32 %v410, %v408
          %v412 = vsub.f32 %v411, %v398
          %v413 = vlog2.pop %v393
          %v414 = vmul.f32 %v413, 0.6931472
          %v415 = vmul.f32 %v401, -0.0005952381
          %v416 = vadd.f32 %v415, 0.0007936508
          %v417 = vmul.f32 %v401, %v416
          %v418 = vadd.f32 %v417, -0.0027777778
          %v419 = vmul.f32 %v401, %v418
          %v420 = vadd.f32 %v419, 0.083333336
          %v421 = vmul.f32 %v400, %v420
          %v422 = vsub.f32 %v399, 0.5
          %v423 = vmul.f32 %v422, %v403
          %v424 = vsub.f32 %v423, %v399
          %v425 = vadd.f32 %v424, 0.9189385
          %v426 = vadd.f32 %v425, %v421
          %v427 = vsub.f32 %v426, %v414
          %v428 = vmul.f32 %v225, %v307
          %v429 = vsel %vm308, %v428, 0.0
          %v430 = vrot.slane %v429, 4
          %v431 = vadd.f32 %v429, %v430
          %v432 = vrot.slane %v431, 2
          %v433 = vadd.f32 %v431, %v432
          %v434 = vrot.slane %v433, 1
          %v435 = vadd.f32 %v433, %v434
          %v436 = vsub.f32 %v292, %v412
          %v437 = vmul.f32 %v365, %v436
          %v438 = vsel %vm308, %v437, 0.0
          %v439 = vrot.slane %v438, 4
          %v440 = vadd.f32 %v438, %v439
          %v441 = vrot.slane %v440, 2
          %v442 = vadd.f32 %v440, %v441
          %v443 = vrot.slane %v442, 1
          %v444 = vadd.f32 %v442, %v443
          %v445 = vadd.f32 %v444, %v427
          %v446 = vsub.f32 %v445, %v435
          %v447 = vsub.f32 %v446, 1.7917595
          %s448 = scalar_lea.vmem [#allocation2], %s236
          %v449 = vld [vmem:[%s448] sm:$0x1]
          %v450 = vstv %s214
          %v451 = vmul.f32 %v450, %v447
          %v452 = vadd.f32 %v363, %v451
          %v453 = vmul.f32 %v452, %v234
          %v454 = vadd.f32 %v449, %v453
          %455 = vst [vmem:[%s448] sm:$0x1] %v454
        $region41: #{tpu_custom_call.1} parent=27 // loop_footer
          %s240 = sadd.s32 1, %s236
        $region42: #{tpu_custom_call.1} parent=27 // loop_footer_branch
          %235 = sbr.rel target = $region38
        $region43: #{tpu_custom_call.1} parent=27 // loop_exit
          _
        // Predicated region
        $region44: #{tpu_custom_call.1} parent=27 // pred_check
          %p456 = pneg %p200
        $region45: #{tpu_custom_call.1} parent=27 // pred_check_branch
          %458 = sbr.rel (%p456) target = $region47
        $region46: #{tpu_custom_call.1} parent=27 // pred_region
          %v459 = vld [vmem:[#allocation2] sm:$0x1]
          %v460 = vld [vmem:[#allocation2 + $0x1] sm:$0x1]
          %v461 = vld [vmem:[#allocation2 + $0x2] sm:$0x1]
          %v462 = vld [vmem:[#allocation2 + $0x3] sm:$0x1]
          %v463 = vld [vmem:[#allocation2 + $0x4] sm:$0x1]
          %v464 = vld [vmem:[#allocation2 + $0x5] sm:$0x1]
          %v465 = vld [vmem:[#allocation2 + $0x6] sm:$0x1]
          %v466 = vld [vmem:[#allocation2 + $0x7] sm:$0x1]
          %vm467 = vcmask 1040384
          %v468 = vsel %vm467, %v459, 0.0
          %469 = vadd.xlane.f32.xlu0 %v468
          %v470 = vpop.xlane.xlu0 %469
          %v471 = vsel %vm467, %v460, 0.0
          %472 = vadd.xlane.f32.xlu0 %v471
          %v473 = vpop.xlane.xlu0 %472
          %v474 = vsel %vm467, %v461, 0.0
          %475 = vadd.xlane.f32.xlu0 %v474
          %v476 = vpop.xlane.xlu0 %475
          %v477 = vsel %vm467, %v462, 0.0
          %478 = vadd.xlane.f32.xlu0 %v477
          %v479 = vpop.xlane.xlu0 %478
          %v480 = vsel %vm467, %v463, 0.0
          %481 = vadd.xlane.f32.xlu0 %v480
          %v482 = vpop.xlane.xlu0 %481
          %v483 = vsel %vm467, %v464, 0.0
          %484 = vadd.xlane.f32.xlu0 %v483
          %v485 = vpop.xlane.xlu0 %484
          %v486 = vsel %vm467, %v465, 0.0
          %487 = vadd.xlane.f32.xlu0 %v486
          %v488 = vpop.xlane.xlu0 %487
          %v489 = vsel %vm467, %v466, 0.0
          %490 = vadd.xlane.f32.xlu0 %v489
          %v491 = vpop.xlane.xlu0 %490
          %v492 = vmul.f32 %v470, 0.125
          %v493 = vmul.f32 %v473, 0.125
          %v494 = vmul.f32 %v476, 0.125
          %v495 = vmul.f32 %v479, 0.125
          %v496 = vmul.f32 %v482, 0.125
          %v497 = vmul.f32 %v485, 0.125
          %v498 = vmul.f32 %v488, 0.125
          %v499 = vmul.f32 %v491, 0.125
          %v508 = vrot.slane %v493, 7
          %vm509 = vcmask 1041409
          %v510 = vsel %vm509, %v508, %v492
          %v511 = vrot.slane %v494, 6
          %vm512 = vcmask 1042434
          %v513 = vsel %vm512, %v511, %v510
          %v514 = vrot.slane %v495, 5
          %vm515 = vcmask 1043459
          %v516 = vsel %vm515, %v514, %v513
          %v517 = vrot.slane %v496, 4
          %vm518 = vcmask 1044484
          %v519 = vsel %vm518, %v517, %v516
          %v520 = vrot.slane %v497, 3
          %vm521 = vcmask 1045509
          %v522 = vsel %vm521, %v520, %v519
          %v523 = vrot.slane %v498, 2
          %vm524 = vcmask 1046534
          %v525 = vsel %vm524, %v523, %v522
          %v526 = vrot.slane %v499, 1
          %vm527 = vcmask 1047559
          %v528 = vsel %vm527, %v526, %v525
          %530 = vst [vmem:[%s193] sm:$0xff] %v528
        $region47: #{tpu_custom_call.1} parent=27 // pred_fallthru
          _
        %s531 = sand.u32 %s97, 1
        %s532 = scalar_lea.sflag [#allocation7], %s531
        %s533 = sand.u32 %s97, 1
        %s534 = smul.addr %s533, 8
        %s535 = scalar_lea.vmem [#allocation8], %s534
        // Predicated region
        $region48: #{tpu_custom_call.1} parent=27 // pred_check
          %p536 = pneg %p107
        $region49: #{tpu_custom_call.1} parent=27 // pred_check_branch
          %538 = sbr.rel (%p536) target = $region51
        $region50: #{tpu_custom_call.1} parent=27 // pred_region
          %s540 = ssub.s32 128, 128
          %541 = vsyncadd %s532, %s540
          %s542 = smul.addr %s25, 128
          %s543 = scalar_lea.hbm %s3, %s542
          %s545 = sshll.u32 %s535, 4
          %s546 = int_to_ptr.vmem [resolvable:$true] %s545
          %548 = dma.vmem_to_hbm [thread:$0]  %s546, 128, %s543, %s532
        $region51: #{tpu_custom_call.1} parent=27 // pred_fallthru
          _
      $region28: #{tpu_custom_call.1} parent=5 // pred_fallthru
        _
      %p549 = scmp.le.s32.totalorder 2, %s16
      // Predicated region
      $region52: #{tpu_custom_call.1} parent=5 // pred_check
        %p550 = pneg %p549
      $region53: #{tpu_custom_call.1} parent=5 // pred_check_branch
        %552 = sbr.rel (%p550) target = $region55
      $region54: #{tpu_custom_call.1} parent=5 // pred_region
        %s553 = ssub.s32 %s16, 2
        // Predicated region
        $region56: #{tpu_custom_call.1} parent=54 // pred_check
          %p554 = pneg %p113
        $region57: #{tpu_custom_call.1} parent=54 // pred_check_branch
          %556 = sbr.rel (%p554) target = $region59
        $region58: #{tpu_custom_call.1} parent=54 // pred_region
          %s557 = sand.u32 %s98, 1
          %s558 = scalar_lea.sflag [#allocation7], %s557
          %s559 = sand.u32 %s98, 1
          %s560 = smul.addr %s559, 8
          %s561 = scalar_lea.vmem [#allocation8], %s560
          %562 = dma.done %s558, 128
        $region59: #{tpu_custom_call.1} parent=54 // pred_fallthru
          _
      $region55: #{tpu_custom_call.1} parent=5 // pred_fallthru
        _
    $region6: #{tpu_custom_call.1} parent=1 // loop_footer
      %s20 = sadd.s32 1, %s16
    $region7: #{tpu_custom_call.1} parent=1 // loop_footer_branch
      %15 = sbr.rel target = $region3
    $region8: #{tpu_custom_call.1} parent=1 // loop_exit
      _
    %563 = vsyncpa [#allocation6], 1
    %s564 = scalar_lea.sflag [#allocation6], 1
    %565 = vsyncpa %s564, 1
    %566 = vsyncpa [#allocation7], 1
    %s567 = scalar_lea.sflag [#allocation7], 1
    %568 = vsyncpa %s567, 1

</llo_original>
